<compile_context>
chip_gen: v7x
topology: tpu7x:2x2x1
jax: 0.10.0
libtpu: 0.0.40
codegen_flags: <defaults>
</compile_context>

<pallas_src>
import functools

import jax
import jax.numpy as jnp
from jax.experimental import pallas as pl
from jax.experimental.pallas import tpu as pltpu


_VMEM = pl.BlockSpec(memory_space=pltpu.MemorySpace.VMEM)


def _round_up(x, m):
    return ((x + m - 1) // m) * m


def _pick_tile(n, cap):
    """Largest multiple of 128 dividing n that is <= cap (falls back to n)."""
    if n <= cap:
        return n
    t = (cap // 128) * 128
    while t >= 128:
        if n % t == 0:
            return t
        t -= 128
    return n


# ----------------------------------------------------------------------------
# Encoder: gridded mean-pool over THW + fused two-head linear
# ----------------------------------------------------------------------------
def encoder_kernel(x_ref, w_ref, b_ref, a_ref, c_ref, acc_ref, *, inv_thw, dim):
    t = pl.program_id(0)

    @pl.when(t == 0)
    def _():
        acc_ref[...] = jnp.zeros_like(acc_ref)

    x = x_ref[...]                                    # (NB, Cin, tile) f32
    acc = acc_ref[...]
    nchunks = x.shape[-1] // 128
    # Per-tile accumulation stays on the VPU (lane-chunk adds); the single
    # cross-lane (XLU) reduce happens once, at the final grid step.
    for j in range(nchunks):
        acc = acc + x[:, :, j * 128:(j + 1) * 128]
    acc_ref[...] = acc

    @pl.when(t == pl.num_programs(0) - 1)
    def _():
        pooled = jnp.sum(acc_ref[...], axis=-1) * inv_thw            # (NB, Cin)
        out = (jnp.dot(pooled, w_ref[...],
                       preferred_element_type=jnp.float32)
               + b_ref[...])                                         # (NB, 2*dim)
        a_ref[...] = out[:, :dim]
        c_ref[...] = out[:, dim:]


def encoder_apply(params, x5d, *, thw_tile=2048):
    """Synthetic base_encoder on a (NB, C, T, H, W) batch -> (A, C) features."""
    NB, C, T, H, W = x5d.shape
    THW = T * H * W
    D2 = params["w"].shape[1]
    D = D2 // 2
    x = x5d.reshape(NB, C, THW).astype(jnp.float32)

    tile = max(128, min(int(thw_tile), THW))
    tile = (tile // 128) * 128
    thw_pad = _round_up(THW, tile)
    if thw_pad != THW:
        # zero padding does not change the sum; the mean divides by true THW
        x = jnp.pad(x, ((0, 0), (0, 0), (0, thw_pad - THW)))
    grid = (thw_pad // tile,)

    # NOTE: blocks keep C (< 8) on the sublane axis; a (NB*C, THW) layout would
    # DMA denser but needs an in-kernel (NB*C,1)->(NB,C) relayout for the head
    # matmul, which Mosaic handles poorly.  The real base_encoder would be a
    # separate kernel anyway.
    a, c = pl.pallas_call(
        functools.partial(encoder_kernel, inv_thw=1.0 / float(THW), dim=D),
        out_shape=(jax.ShapeDtypeStruct((NB, D), jnp.float32),
                   jax.ShapeDtypeStruct((NB, D), jnp.float32)),
        grid_spec=pltpu.PrefetchScalarGridSpec(
            num_scalar_prefetch=0,
            grid=grid,
            in_specs=[pl.BlockSpec((NB, C, tile), lambda t: (0, 0, t)),
                      pl.BlockSpec((C, D2), lambda t: (0, 0)),
                      pl.BlockSpec((1, D2), lambda t: (0, 0))],
            out_specs=(pl.BlockSpec((NB, D), lambda t: (0, 0)),
                       pl.BlockSpec((NB, D), lambda t: (0, 0))),
            scratch_shapes=[pltpu.VMEM((NB, C, 128), jnp.float32)],
        ),
        compiler_params=pltpu.CompilerParams(
            dimension_semantics=("arbitrary",)),
    )(x, params["w"], params["b"])
    return a, c


# ----------------------------------------------------------------------------
# Predictor MLP: (Linear + BatchNorm1d(train) + ReLU) x (layer-1), then Linear.
# Several independent predictor calls are batched along rows; BN statistics are
# computed per original call-group (group_size rows) so results are identical
# to running the calls separately.
# ----------------------------------------------------------------------------
def predictor_kernel(x_ref, wh_ref, bh_ref, g_ref, bt_ref, wl_ref, bl_ref,
                     o_ref, *, num_hidden, group_size):
    h = x_ref[...]                                    # (G*B, D)
    GB = h.shape[0]
    B = group_size
    G = GB // B
    for i in range(num_hidden):
        h = (jnp.dot(h, wh_ref[i], preferred_element_type=jnp.float32)
             + bh_ref[i])
        # BatchNorm1d training mode: biased batch stats, eps = 1e-5, per group.
        outs = []
        for g in range(G):
            hg = h[g * B:(g + 1) * B, :]
            mu = jnp.mean(hg, axis=0, keepdims=True)
            var = jnp.mean(jnp.square(hg - mu), axis=0, keepdims=True)
            hg = (hg - mu) * jax.lax.rsqrt(var + 1e-5)
            outs.append(jnp.maximum(hg * g_ref[i] + bt_ref[i], 0.0))
        h = outs[0] if G == 1 else jnp.concatenate(outs, axis=0)
    o_ref[...] = (jnp.dot(h, wl_ref[...], preferred_element_type=jnp.float32)
                  + bl_ref[...])


def predictor_apply(params, x, group_size):
    GB, D = x.shape
    nh = params["wh"].shape[0]
    return pl.pallas_call(
        functools.partial(predictor_kernel, num_hidden=nh,
                          group_size=group_size),
        out_shape=jax.ShapeDtypeStruct((GB, D), jnp.float32),
        in_specs=[_VMEM] * 7,
        out_specs=_VMEM,
    )(x, params["wh"], params["bh"], params["g"], params["bt"],
      params["wl"], params["bl"])


def _run_pred(params, inputs, batch):
    """One pallas_call for several independent predictor calls."""
    x = inputs[0] if len(inputs) == 1 else jnp.concatenate(inputs, axis=0)
    out = predictor_apply(params, x, batch)
    return [out[i * batch:(i + 1) * batch] for i in range(len(inputs))]


# ----------------------------------------------------------------------------
# Contrastive logits: single stacked (3B, D) x bf16 queue tile matmul per step,
# K gridded (parallel -> megacore on v7x), f32 accumulation.
# ----------------------------------------------------------------------------
def neg_logits_kernel(aq_ref, q_ref, neg_ref, *, inv_t):
    neg_ref[...] = (jnp.dot(aq_ref[...], q_ref[...],
                            preferred_element_type=jnp.float32)
                    * jnp.float32(inv_t))


def contrast_logits(aqp, aqc, aqf, ak, queue_bf16, temperature, *, max_tk=4096):
    B, D = aqp.shape
    K = queue_bf16.shape[1]
    inv_t = 1.0 / float(temperature)

    # positives: 3*B*D flops -- done in XLA (a (B,3) kernel output would only
    # produce masked sub-128-lane stores and block the parallel K axis).
    pos = jnp.stack([jnp.sum(aqp * ak, axis=1),
                     jnp.sum(aqc * ak, axis=1),
                     jnp.sum(aqf * ak, axis=1)], axis=1) * inv_t      # (B, 3)

    aq = jnp.concatenate([aqp, aqc, aqf], axis=0).astype(jnp.bfloat16)  # (3B, D)
    tk = _pick_tile(K, max_tk)      # tk <= 4096 keeps buffers well under v7x VMEM
    neg_all = pl.pallas_call(
        functools.partial(neg_logits_kernel, inv_t=inv_t),
        out_shape=jax.ShapeDtypeStruct((3 * B, K), jnp.float32),
        grid_spec=pltpu.PrefetchScalarGridSpec(
            num_scalar_prefetch=0,
            grid=(K // tk,),
            in_specs=[pl.BlockSpec((3 * B, D), lambda k: (0, 0)),
                      pl.BlockSpec((D, tk), lambda k: (0, k))],
            out_specs=pl.BlockSpec((3 * B, tk), lambda k: (0, k)),
        ),
        compiler_params=pltpu.CompilerParams(
            dimension_semantics=("parallel",),
            vmem_limit_bytes=32 * 1024 * 1024),
    )(aq, queue_bf16)

    # TODO(synk): the k-major / m-minor interleave (matching torch
    # neg_A.reshape(B, -1)) stays in XLA; doing it in-kernel needs a
    # (B, tk, 3) -> (B, 3*tk) lane relayout that Mosaic lowers poorly.
    neg = jnp.transpose(neg_all.reshape(3, B, K), (1, 2, 0)).reshape(B, 3 * K)
    return jnp.concatenate([pos, neg], axis=1)                 # (B, 3 + 3K)


# ----------------------------------------------------------------------------
# Parameter construction (deterministic)
# ----------------------------------------------------------------------------
def _linear(key, fan_in, fan_out, scale=0.1):
    kw, kb = jax.random.split(key)
    w = scale * jax.random.normal(kw, (fan_in, fan_out), jnp.float32)
    b = scale * jax.random.normal(kb, (1, fan_out), jnp.float32)
    return w, b


def make_encoder_params(key, cin, dim):
    ka, kc = jax.random.split(key)
    wa, ba = _linear(ka, cin, dim)
    wc, bc = _linear(kc, cin, dim)
    # fused heads: one (cin, 2*dim) matmul produces both A and C features
    return {"w": jnp.concatenate([wa, wc], axis=1),
            "b": jnp.concatenate([ba, bc], axis=1)}


def make_predictor_params(key, dim, layer):
    num_hidden = layer - 1
    keys = jax.random.split(key, num_hidden + 1)
    wh, bh = [], []
    for i in range(num_hidden):
        w, b = _linear(keys[i], dim, dim)
        wh.append(w)
        bh.append(b[None])
    wl, bl = _linear(keys[-1], dim, dim)
    return {
        "wh": jnp.stack(wh, axis=0),                      # (nh, D, D)
        "bh": jnp.concatenate(bh, axis=0),                # (nh, 1, D)
        "g": jnp.ones((num_hidden, 1, dim), jnp.float32),  # BN gamma
        "bt": jnp.zeros((num_hidden, 1, dim), jnp.float32),  # BN beta
        "wl": wl,                                         # (D, D)
        "bl": bl,                                         # (1, D)
    }


# ----------------------------------------------------------------------------
# CepLossBuilder (functional re-implementation)
# ----------------------------------------------------------------------------
class CepLossBuilderPallas:
    def __init__(self, cin, dim=128, K=65536, m=0.999, T=0.07,
                 predictor_layer=(4, 4), seed=0,
                 encoder_thw_tile=2048, logits_k_tile=4096):
        self.K = K
        self.m = m
        self.T = T
        self.encoder_thw_tile = encoder_thw_tile
        self.logits_k_tile = logits_k_tile
        key = jax.random.PRNGKey(seed)
        ks = jax.random.split(key, 5)
        self.enc_q = make_encoder_params(ks[0], cin, dim)
        # key encoder initialized as an exact copy of encoder_q
        self.enc_k = jax.tree_util.tree_map(lambda x: x, self.enc_q)
        self.fwd_pred = make_predictor_params(ks[1], dim, predictor_layer[0])
        self.bwd_pred = make_predictor_params(ks[2], dim, predictor_layer[1])
        q = jax.random.normal(ks[3], (dim, K), jnp.float32)
        q = q / jnp.linalg.norm(q, axis=0, keepdims=True)
        # bf16 queue: halves HBM traffic of the dominant (memory-bound) matmul
        self.queue = q.astype(jnp.bfloat16)
        self.queue_ptr = 0
        self._select_key = ks[4]

    # -------------------- no_grad helpers --------------------
    def _momentum_update_key_encoder(self):
        self.enc_k = jax.tree_util.tree_map(
            lambda pk, pq: pk * self.m + pq * (1.0 - self.m),
            self.enc_k, self.enc_q)

    def selecting_k_op(self, im_k):
        _, _, T, _, _ = im_k.shape
        self._select_key, sub = jax.random.split(self._select_key)  # fresh draw
        perm = jax.random.permutation(sub, T)
        selected = jnp.sort(perm[: T // 3])
        return jnp.take(im_k, selected, axis=2)

    def split_op(self, im):
        _, _, T, _, _ = im.shape
        assert T % 3 == 0
        s = T // 3
        return im[:, :, :s], im[:, :, s:2 * s], im[:, :, 2 * s:]

    def _dequeue_and_enqueue(self, keys):
        # concat_all_gather is identity at world_size == 1
        batch_size = keys.shape[0]
        assert self.K % batch_size == 0
        ptr = int(self.queue_ptr)
        self.queue = jax.lax.dynamic_update_slice(
            self.queue, keys.T.astype(self.queue.dtype), (0, ptr))
        self.queue_ptr = (ptr + batch_size) % self.K

    # -------------------- forward --------------------
    def forward(self, im_q, im_k):
        B = im_q.shape[0]
        self._momentum_update_key_encoder()
        im_k_selected = self.selecting_k_op(im_k)
        im_q_p, im_q_c, im_q_f = self.split_op(im_q)

        # ---- key encoder: 4 reference calls fused into one pallas_call ----
        k_in = jnp.concatenate([im_k_selected, im_q_p, im_q_c, im_q_f], axis=0)
        A_k_all, C_k_all = encoder_apply(self.enc_k, k_in,
                                         thw_tile=self.encoder_thw_tile)
        A_k = A_k_all[:B]
        C_k_p = C_k_all[B:2 * B]
        C_k_c = C_k_all[2 * B:3 * B]
        C_k_f = C_k_all[3 * B:]

        # ---- query encoder: 3 reference calls fused into one pallas_call ----
        q_in = jnp.concatenate([im_q_p, im_q_c, im_q_f], axis=0)
        A_q_all, C_q_all = encoder_apply(self.enc_q, q_in,
                                         thw_tile=self.encoder_thw_tile)
        A_q_p, A_q_c, A_q_f = A_q_all[:B], A_q_all[B:2 * B], A_q_all[2 * B:]
        C_q_p, C_q_c, C_q_f = C_q_all[:B], C_q_all[B:2 * B], C_q_all[2 * B:]

        # ---- predictors, batched by dependency round (BN stats per group) ----
        Fp, Fc = _run_pred(self.fwd_pred, [C_q_p, C_q_c], B)   # F(p), F(c)
        Bf, Bc = _run_pred(self.bwd_pred, [C_q_f, C_q_c], B)   # B(f), B(c)
        C_q_c_, C_q_f_, C_q_c__, C_q_p_ = Fp, Fc, Bf, Bc

        C_q_f__, C_q_b_f, C_q_b_c_ = _run_pred(self.fwd_pred, [Fp, Bf, Bc], B)
        C_q_p__, C_q_b_p, C_q_b_c = _run_pred(self.bwd_pred, [Bf, Fp, Fc], B)

        (t_f,) = _run_pred(self.fwd_pred, [C_q_p__], B)        # F(C_q_p__)
        (t_b,) = _run_pred(self.bwd_pred, [C_q_f__], B)        # B(C_q_f__)
        (C_q_b_f_,) = _run_pred(self.fwd_pred, [t_f], B)       # F(F(C_q_p__))
        (C_q_b_p_,) = _run_pred(self.bwd_pred, [t_b], B)       # B(B(C_q_f__))

        # ---- pos/neg logits against the queue snapshot before enqueue ----
        logits_A = contrast_logits(A_q_p, A_q_c, A_q_f, A_k, self.queue,
                                   self.T, max_tk=self.logits_k_tile)
        mask_A = jnp.zeros((B, logits_A.shape[1]), jnp.int32).at[:, :3].set(1)
        # (reference code prints logits shape here; omitted to keep output clean)

        CL = [(C_q_p_, C_k_p), (C_q_p__, C_k_p),
              (C_q_c_, C_k_c), (C_q_c__, C_k_c),
              (C_q_f_, C_k_f), (C_q_f__, C_k_f)]
        CC = [(C_k_p, C_q_b_p), (C_k_p, C_q_b_p_),
              (C_k_c, C_q_b_c), (C_k_c, C_q_b_c_),
              (C_k_f, C_q_b_f), (C_k_f, C_q_b_f_)]

        self._dequeue_and_enqueue(A_k)
        return logits_A, mask_A, CL, CC


# ----------------------------------------------------------------------------
# main
# ----------------------------------------------------------------------------
if __name__ == "__main__":
    B, Cin, T, H, W = 4, 4, 6, 16, 16     # T divisible by 3
    DIM, K = 128, 1024                    # lane-aligned dim; K % B == 0

    key = jax.random.PRNGKey(0)
    kq, kk = jax.random.split(key)
    im_q = jax.random.normal(kq, (B, Cin, T, H, W), jnp.float32)
    im_k = jax.random.normal(kk, (B, Cin, T, H, W), jnp.float32)

    builder = CepLossBuilderPallas(
        cin=Cin, dim=DIM, K=K, m=0.999, T=0.07, predictor_layer=(4, 4), seed=0,
        encoder_thw_tile=256,   # -> 2 grid steps over THW=512 in this toy config
        logits_k_tile=256)      # -> 4 grid steps over K=1024

    logits_A, mask_A, CL, CC = builder.forward(im_q, im_k)

    jax.block_until_ready(logits_A)
    jax.block_until_ready(mask_A)
    for a, b in CL + CC:
        jax.block_until_ready(a)
        jax.block_until_ready(b)
    jax.block_until_ready(builder.queue)

    assert logits_A.shape == (B, 3 + 3 * K)
    assert mask_A.shape == logits_A.shape
    for a, b in CL + CC:
        assert a.shape == (B, DIM) and b.shape == (B, DIM)
    print("KERNEL_OK")
</pallas_src>

<mosaic_0001>
module attributes {stable_mosaic.version = 11 : i64} {
  func.func @encoder_kernel(%arg0: i32, %arg1: memref<16x4x256xf32, #tpu.memory_space<vmem>>, %arg2: memref<4x256xf32, #tpu.memory_space<vmem>>, %arg3: memref<1x256xf32, #tpu.memory_space<vmem>>, %arg4: memref<16x128xf32, #tpu.memory_space<vmem>>, %arg5: memref<16x128xf32, #tpu.memory_space<vmem>>, %arg6: memref<16x4x128xf32, #tpu.memory_space<vmem>>) attributes {dimension_semantics = [#tpu.dimension_semantics<arbitrary>], iteration_bounds = array<i64: 2>, scalar_prefetch = 0 : i64, scratch_operands = 1 : i64, tpu.core_type = #tpu.core_type<tc>, window_params = [{transform_indices = @transform_0, window_bounds = array<i64: 16, 4, 256>}, {pipeline_mode = #tpu.pipeline_mode<synchronous>, transform_indices = @transform_1, window_bounds = array<i64: 4, 256>}, {pipeline_mode = #tpu.pipeline_mode<synchronous>, transform_indices = @transform_2, window_bounds = array<i64: 1, 256>}, {pipeline_mode = #tpu.pipeline_mode<synchronous>, transform_indices = @transform_3, window_bounds = array<i64: 16, 128>}, {pipeline_mode = #tpu.pipeline_mode<synchronous>, transform_indices = @transform_4, window_bounds = array<i64: 16, 128>}]} {
    %c0_i32 = arith.constant 0 : i32
    %0 = arith.cmpi eq, %arg0, %c0_i32 : i32
    %1 = arith.extui %0 : i1 to i32
    %c0_i32_0 = arith.constant 0 : i32
    %2 = arith.cmpi ne, %1, %c0_i32_0 : i32
    scf.if %2 {
      %cst = arith.constant 0.000000e+00 : f32
      %13 = vector.broadcast %cst : f32 to vector<16x4x128xf32>
      %c0_10 = arith.constant 0 : index
      %c0_11 = arith.constant 0 : index
      %c0_12 = arith.constant 0 : index
      %14 = vector.load %arg6[%c0_10, %c0_11, %c0_12] : memref<16x4x128xf32, #tpu.memory_space<vmem>>, vector<16x4x128xf32>
      tpu.vector_store %arg6[%c0_10, %c0_11, %c0_12], %13 {strides = array<i32>} : memref<16x4x128xf32, #tpu.memory_space<vmem>>, vector<16x4x128xf32>,
    } else {
    }
    %c0 = arith.constant 0 : index
    %c0_1 = arith.constant 0 : index
    %c0_2 = arith.constant 0 : index
    %3 = vector.load %arg1[%c0, %c0_1, %c0_2] : memref<16x4x256xf32, #tpu.memory_space<vmem>>, vector<16x4x256xf32>
    %c0_3 = arith.constant 0 : index
    %c0_4 = arith.constant 0 : index
    %c0_5 = arith.constant 0 : index
    %4 = vector.load %arg6[%c0_3, %c0_4, %c0_5] : memref<16x4x128xf32, #tpu.memory_space<vmem>>, vector<16x4x128xf32>
    %5 = vector.extract_strided_slice %3 {offsets = [0, 0, 0], sizes = [16, 4, 128], strides = [1, 1, 1]} : vector<16x4x256xf32> to vector<16x4x128xf32>
    %6 = arith.addf %4, %5 : vector<16x4x128xf32>
    %7 = vector.extract_strided_slice %3 {offsets = [0, 0, 128], sizes = [16, 4, 128], strides = [1, 1, 1]} : vector<16x4x256xf32> to vector<16x4x128xf32>
    %8 = arith.addf %6, %7 : vector<16x4x128xf32>
    %c0_6 = arith.constant 0 : index
    %c0_7 = arith.constant 0 : index
    %c0_8 = arith.constant 0 : index
    %9 = vector.load %arg6[%c0_6, %c0_7, %c0_8] : memref<16x4x128xf32, #tpu.memory_space<vmem>>, vector<16x4x128xf32>
    tpu.vector_store %arg6[%c0_6, %c0_7, %c0_8], %8 {strides = array<i32>} : memref<16x4x128xf32, #tpu.memory_space<vmem>>, vector<16x4x128xf32>,
    %c1_i32 = arith.constant 1 : i32
    %10 = arith.cmpi eq, %arg0, %c1_i32 : i32
    %11 = arith.extui %10 : i1 to i32
    %c0_i32_9 = arith.constant 0 : i32
    %12 = arith.cmpi ne, %11, %c0_i32_9 : i32
    scf.if %12 {
      %c0_10 = arith.constant 0 : index
      %c0_11 = arith.constant 0 : index
      %c0_12 = arith.constant 0 : index
      %13 = vector.load %arg6[%c0_10, %c0_11, %c0_12] : memref<16x4x128xf32, #tpu.memory_space<vmem>>, vector<16x4x128xf32>
      %cst = arith.constant dense<0.000000e+00> : vector<16x4xf32>
      %14 = vector.multi_reduction <add>, %13, %cst [2] : vector<16x4x128xf32> to vector<16x4xf32>
      %cst_13 = arith.constant 0.001953125 : f32
      %15 = vector.broadcast %cst_13 : f32 to vector<16x4xf32>
      %16 = arith.mulf %14, %15 : vector<16x4xf32>
      %c0_14 = arith.constant 0 : index
      %c0_15 = arith.constant 0 : index
      %17 = vector.load %arg2[%c0_14, %c0_15] : memref<4x256xf32, #tpu.memory_space<vmem>>, vector<4x256xf32>
      %cst_16 = arith.constant dense<0.000000e+00> : vector<16x256xf32>
      %18 = tpu.matmul %16, %17, %cst_16 {dimension_numbers = #tpu.dot_dimension_numbers<[1], [0], [0], [1], [0, 0, 1, 1], [], []>} : vector<16x4xf32>, vector<4x256xf32>, vector<16x256xf32> -> vector<16x256xf32>
      %c0_17 = arith.constant 0 : index
      %c0_18 = arith.constant 0 : index
      %19 = vector.load %arg3[%c0_17, %c0_18] : memref<1x256xf32, #tpu.memory_space<vmem>>, vector<1x256xf32>
      %20 = vector.broadcast %19 : vector<1x256xf32> to vector<16x256xf32>
      %21 = arith.addf %18, %20 : vector<16x256xf32>
      %22 = vector.extract_strided_slice %21 {offsets = [0, 0], sizes = [16, 128], strides = [1, 1]} : vector<16x256xf32> to vector<16x128xf32>
      %c0_19 = arith.constant 0 : index
      %c0_20 = arith.constant 0 : index
      %23 = vector.load %arg4[%c0_19, %c0_20] : memref<16x128xf32, #tpu.memory_space<vmem>>, vector<16x128xf32>
      tpu.vector_store %arg4[%c0_19, %c0_20], %22 {strides = array<i32>} : memref<16x128xf32, #tpu.memory_space<vmem>>, vector<16x128xf32>,
      %24 = vector.extract_strided_slice %21 {offsets = [0, 128], sizes = [16, 128], strides = [1, 1]} : vector<16x256xf32> to vector<16x128xf32>
      %c0_21 = arith.constant 0 : index
      %c0_22 = arith.constant 0 : index
      %25 = vector.load %arg5[%c0_21, %c0_22] : memref<16x128xf32, #tpu.memory_space<vmem>>, vector<16x128xf32>
      tpu.vector_store %arg5[%c0_21, %c0_22], %24 {strides = array<i32>} : memref<16x128xf32, #tpu.memory_space<vmem>>, vector<16x128xf32>,
    } else {
    }
    return
  }
  func.func @transform_0(%arg0: i32) -> (i32, i32, i32) {
    %c0_i32 = arith.constant 0 : i32
    %c0_i32_0 = arith.constant 0 : i32
    %c0_i32_1 = arith.constant 0 : i32
    return %c0_i32, %c0_i32_0, %arg0 : i32, i32, i32
  }
  func.func @transform_1(%arg0: i32) -> (i32, i32) {
    %c0_i32 = arith.constant 0 : i32
    %c0_i32_0 = arith.constant 0 : i32
    %c0_i32_1 = arith.constant 0 : i32
    return %c0_i32, %c0_i32_0 : i32, i32
  }
  func.func @transform_2(%arg0: i32) -> (i32, i32) {
    %c0_i32 = arith.constant 0 : i32
    %c0_i32_0 = arith.constant 0 : i32
    %c0_i32_1 = arith.constant 0 : i32
    return %c0_i32, %c0_i32_0 : i32, i32
  }
  func.func @transform_3(%arg0: i32) -> (i32, i32) {
    %c0_i32 = arith.constant 0 : i32
    %c0_i32_0 = arith.constant 0 : i32
    %c0_i32_1 = arith.constant 0 : i32
    return %c0_i32, %c0_i32_0 : i32, i32
  }
  func.func @transform_4(%arg0: i32) -> (i32, i32) {
    %c0_i32 = arith.constant 0 : i32
    %c0_i32_0 = arith.constant 0 : i32
    %c0_i32_1 = arith.constant 0 : i32
    return %c0_i32, %c0_i32_0 : i32, i32
  }
}

</mosaic_0001>

<llo_original>
// kernel: tpu_custom_call.1
$region0: #{tpu_custom_call.1}
  #allocation0 [shape = 'u32[]', space=smem, size = 0x4, offset = 0x4, fixed_abs, tag = 'smem constant byte address 0x4 - core index']
  #allocation1 [shape = 'u32[144,128]{1,0:T(1,128)}', space=vmem, size = 0x12000, scoped, tag = 'internal scratch']
  #allocation2 [shape = 'f32[16,4,128]{2,1,0:T(4,128)}', space=vmem, size = 0x8000, scoped, tag = 'scratch operand']
  %s0 = inlined_call_operand.hbm [shape: f32[16,4,512], index: 0, kind: input, shape index: {}]
  %s1 = inlined_call_operand.hbm [shape: f32[4,256], index: 1, kind: input, shape index: {}]
  %s2 = inlined_call_operand.vmem [shape: f32[1,256], index: 2, kind: input, shape index: {}]
  %s3 = inlined_call_operand.hbm [shape: f32[16,128], index: 3, kind: output, shape index: {0}]
  %s4 = inlined_call_operand.hbm [shape: f32[16,128], index: 4, kind: output, shape index: {1}]
  %5 = xla_tuple %s3, %s4
  %s6 = sld [smem:[#allocation0]]
  $region69: #{tpu_custom_call.1} parent=0
    _
  %s8 = ssub.s32 1, %s6
  %s9 = scalar_select 0, %s8, %s6
  $region1: #{tpu_custom_call.1} parent=0
    #allocation3 [shape = 'u8[131072]{0}', space=vmem, size = 0x20000, scoped, tag = 'input window, operand 0']
    #allocation4 [shape = 's32[2]{0}', space=sflag, size = 0x8, scoped, tag = 'scoped memory for tpu_custom_call.1']
    #allocation5 [shape = 's32[2]{0}', space=sflag, size = 0x8, scoped, tag = 'scoped memory for tpu_custom_call.1']
    #allocation6 [shape = 'u8[4096]{0}', space=vmem, size = 0x1000, scoped, tag = 'input window, operand 1, single buffered']
    #allocation7 [shape = 's32[1]{0}', space=sflag, size = 0x4, scoped, tag = 'scoped memory for tpu_custom_call.1']
    #allocation8 [shape = 'u8[8192]{0}', space=vmem, size = 0x2000, scoped, tag = 'output window, operand 0, single buffered']
    #allocation9 [shape = 'u8[8192]{0}', space=vmem, size = 0x2000, scoped, tag = 'output window, operand 1, single buffered']
    #allocation10 [shape = 's32[1]{0}', space=sflag, size = 0x4, scoped, tag = 'scoped memory for tpu_custom_call.1']
    %10 = vsyncpa [#allocation4], 0
    %s11 = scalar_lea.sflag [#allocation4], 1
    %12 = vsyncpa %s11, 0
    %13 = vsyncpa [#allocation7], 0
    %14 = vsyncpa [#allocation5], 0
    %15 = vsyncpa [#allocation10], 0
    loop: start=0, step=1, limit=4
    $region2: #{tpu_custom_call.1} parent=1 // loop_pre_header
      _
    $region3: #{tpu_custom_call.1} parent=1 // loop_header
      %s17 = sphi 0, %s21
      %p18 = scmp.ge.s32.totalorder %s17, 4
      %s27 = sphi 0, %s29
      %s30 = sphi 0, %s27
      %s31 = sphi 0, %s30
      %s47 = sphi 0, %s31
      %s51 = sphi 0, %s51
      %s53 = sphi 0, %s51
      %s54 = sphi 0, %s53
      %s68 = sphi 0, %s54
      %s72 = sphi 0, %s72
      %s74 = sphi 0, %s72
      %s75 = sphi 0, %s74
      %s89 = sphi 0, %s75
      %s93 = sphi 0, %s93
      %s95 = sphi 0, %s93
      %s96 = sphi 0, %s95
      %s110 = sphi 0, %s96
      %s114 = sphi 0, %s114
      %s116 = sphi 0, %s114
      %s117 = sphi 0, %s116
      %s131 = sphi 0, %s117
    $region4: #{tpu_custom_call.1} parent=1 // loop_header_branch
      %20 = sbr.rel (%p18) target = $region8
    $region5: #{tpu_custom_call.1} parent=1 // loop_body
      %s22 = ssub.s32 %s17, 1
      %s23 = ssub.s32 %s17, 2
      %s24 = sadd.s32 %s17, 1
      %s25 = ssub.s32 %s17, %s24
      %p26 = scmp.eq.s32.totalorder %s25, 0
      %s28 = sadd.s32 %s27, 1
      %s29 = scalar_select %p26, %s27, %s28
      %p32 = pneg %p26
      %p33 = scmp.eq.s32.totalorder %s17, 1
      %p34 = por %p32, %p33
      %p35 = scmp.ne.s32.totalorder %s27, %s30
      %p36 = scmp.eq.s32.totalorder %s17, 0
      %p37 = por %p35, %p36
      %p38 = scmp.ne.s32.totalorder %s27, %s30
      %p39 = scmp.eq.s32.totalorder %s22, 1
      %p40 = por %p38, %p39
      %p41 = scmp.ne.s32.totalorder %s30, %s31
      %p42 = scmp.eq.s32.totalorder %s22, 0
      %p43 = por %p41, %p42
      %p44 = scmp.ne.s32.totalorder %s30, %s31
      %p45 = scmp.eq.s32.totalorder %s23, 1
      %p46 = por %p44, %p45
      %p48 = scmp.ne.s32.totalorder %s31, %s47
      %p49 = scmp.eq.s32.totalorder %s23, 0
      %p50 = por %p48, %p49
      %s52 = sadd.s32 %s51, 1
      %p55 = scmp.eq.s32.totalorder %s17, 1
      %p56 = scmp.ne.s32.totalorder %s51, %s53
      %p57 = scmp.eq.s32.totalorder %s17, 0
      %p58 = por %p56, %p57
      %p59 = scmp.ne.s32.totalorder %s51, %s53
      %p60 = scmp.eq.s32.totalorder %s22, 1
      %p61 = por %p59, %p60
      %p62 = scmp.ne.s32.totalorder %s53, %s54
      %p63 = scmp.eq.s32.totalorder %s22, 0
      %p64 = por %p62, %p63
      %p65 = scmp.ne.s32.totalorder %s53, %s54
      %p66 = scmp.eq.s32.totalorder %s23, 1
      %p67 = por %p65, %p66
      %p69 = scmp.ne.s32.totalorder %s54, %s68
      %p70 = scmp.eq.s32.totalorder %s23, 0
      %p71 = por %p69, %p70
      %s73 = sadd.s32 %s72, 1
      %p76 = scmp.eq.s32.totalorder %s17, 1
      %p77 = scmp.ne.s32.totalorder %s72, %s74
      %p78 = scmp.eq.s32.totalorder %s17, 0
      %p79 = por %p77, %p78
      %p80 = scmp.ne.s32.totalorder %s72, %s74
      %p81 = scmp.eq.s32.totalorder %s22, 1
      %p82 = por %p80, %p81
      %p83 = scmp.ne.s32.totalorder %s74, %s75
      %p84 = scmp.eq.s32.totalorder %s22, 0
      %p85 = por %p83, %p84
      %p86 = scmp.ne.s32.totalorder %s74, %s75
      %p87 = scmp.eq.s32.totalorder %s23, 1
      %p88 = por %p86, %p87
      %p90 = scmp.ne.s32.totalorder %s75, %s89
      %p91 = scmp.eq.s32.totalorder %s23, 0
      %p92 = por %p90, %p91
      %s94 = sadd.s32 %s93, 1
      %p97 = scmp.eq.s32.totalorder %s17, 1
      %p98 = scmp.ne.s32.totalorder %s93, %s95
      %p99 = scmp.eq.s32.totalorder %s17, 0
      %p100 = por %p98, %p99
      %p101 = scmp.ne.s32.totalorder %s93, %s95
      %p102 = scmp.eq.s32.totalorder %s22, 1
      %p103 = por %p101, %p102
      %p104 = scmp.ne.s32.totalorder %s95, %s96
      %p105 = scmp.eq.s32.totalorder %s22, 0
      %p106 = por %p104, %p105
      %p107 = scmp.ne.s32.totalorder %s95, %s96
      %p108 = scmp.eq.s32.totalorder %s23, 1
      %p109 = por %p107, %p108
      %p111 = scmp.ne.s32.totalorder %s96, %s110
      %p112 = scmp.eq.s32.totalorder %s23, 0
      %p113 = por %p111, %p112
      %s115 = sadd.s32 %s114, 1
      %p118 = scmp.eq.s32.totalorder %s17, 1
      %p119 = scmp.ne.s32.totalorder %s114, %s116
      %p120 = scmp.eq.s32.totalorder %s17, 0
      %p121 = por %p119, %p120
      %p122 = scmp.ne.s32.totalorder %s114, %s116
      %p123 = scmp.eq.s32.totalorder %s22, 1
      %p124 = por %p122, %p123
      %p125 = scmp.ne.s32.totalorder %s116, %s117
      %p126 = scmp.eq.s32.totalorder %s22, 0
      %p127 = por %p125, %p126
      %p128 = scmp.ne.s32.totalorder %s116, %s117
      %p129 = scmp.eq.s32.totalorder %s23, 1
      %p130 = por %p128, %p129
      %p132 = scmp.ne.s32.totalorder %s117, %s131
      %p133 = scmp.eq.s32.totalorder %s23, 0
      %p134 = por %p132, %p133
      %p135 = scmp.le.s32.totalorder 1, %s17
      %p136 = scmp.lt.s32.totalorder %s17, 3
      %p137 = pnand %p135, %p136
      %p138 = pneg %p137
      // Predicated region
      $region9: #{tpu_custom_call.1} parent=5 // pred_check
        _
      $region10: #{tpu_custom_call.1} parent=5 // pred_check_branch
        %140 = sbr.rel (%p137) target = $region12
      $region11: #{tpu_custom_call.1} parent=5 // pred_region
        %s141 = ssub.s32 %s17, 1
        // Predicated region
        $region13: #{tpu_custom_call.1} parent=11 // pred_check
          %p142 = pneg %p64
        $region14: #{tpu_custom_call.1} parent=11 // pred_check_branch
          %144 = sbr.rel (%p142) target = $region16
        $region15: #{tpu_custom_call.1} parent=11 // pred_region
          %s146 = ssub.s32 128, 128
          %147 = vsyncadd [#allocation7], %s146
          %s149 = sshll.u32 [#allocation6], 4
          %s150 = int_to_ptr.vmem [resolvable:$true] %s149
          %152 = dma.hbm_to_vmem [thread:$0]  %s1, 128, %s150, [#allocation7]
        $region16: #{tpu_custom_call.1} parent=11 // pred_fallthru
          _
        // Predicated region
        $region17: #{tpu_custom_call.1} parent=11 // pred_check
          %p153 = pneg %p85
        $region18: #{tpu_custom_call.1} parent=11 // pred_check_branch
          %155 = sbr.rel (%p153) target = $region20
        $region19: #{tpu_custom_call.1} parent=11 // pred_region
          _
        $region20: #{tpu_custom_call.1} parent=11 // pred_fallthru
          _
      $region12: #{tpu_custom_call.1} parent=5 // pred_fallthru
        _
      %p156 = scmp.lt.s32.totalorder %s17, 2
      // Predicated region
      $region21: #{tpu_custom_call.1} parent=5 // pred_check
        %p157 = pneg %p156
      $region22: #{tpu_custom_call.1} parent=5 // pred_check_branch
        %159 = sbr.rel (%p157) target = $region24
      $region23: #{tpu_custom_call.1} parent=5 // pred_region
        // Predicated region
        $region25: #{tpu_custom_call.1} parent=23 // pred_check
          %p160 = pneg %p37
        $region26: #{tpu_custom_call.1} parent=23 // pred_check_branch
          %162 = sbr.rel (%p160) target = $region28
        $region27: #{tpu_custom_call.1} parent=23 // pred_region
          %s163 = sand.u32 %s27, 1
          %s164 = scalar_lea.sflag [#allocation4], %s163
          %s165 = sand.u32 %s27, 1
          %s166 = smul.addr %s165, 128
          %s167 = scalar_lea.vmem [#allocation3], %s166
          %s168 = smul.u32 2, %s17
          %s170 = ssub.s32 2048, 2048
          %171 = vsyncadd %s164, %s170
          %s172 = smul.addr %s168, 64
          %s173 = scalar_lea.hbm %s0, %s172
          %s174 = sshll.u32 %s167, 4
          %s175 = int_to_ptr.vmem [resolvable:$true] %s174
          %180 = dma.hbm_to_vmem [thread:$0]  %s173, 2048, %s175, %s164, 256, 128, 8
        $region28: #{tpu_custom_call.1} parent=23 // pred_fallthru
          _
      $region24: #{tpu_custom_call.1} parent=5 // pred_fallthru
        _
      %p181 = scmp.le.s32.totalorder 1, %s17
      %p182 = scmp.lt.s32.totalorder %s17, 3
      %p183 = pnand %p181, %p182
      %p184 = pneg %p183
      // Predicated region
      $region29: #{tpu_custom_call.1} parent=5 // pred_check
        _
      $region30: #{tpu_custom_call.1} parent=5 // pred_check_branch
        %186 = sbr.rel (%p183) target = $region32
      $region31: #{tpu_custom_call.1} parent=5 // pred_region
        %s187 = ssub.s32 %s17, 1
        %s188 = sand.u32 %s30, 1
        %s189 = scalar_lea.sflag [#allocation4], %s188
        %s190 = sand.u32 %s30, 1
        %s191 = smul.addr %s190, 128
        %s192 = scalar_lea.vmem [#allocation3], %s191
        // Predicated region
        $region33: #{tpu_custom_call.1} parent=31 // pred_check
          %p193 = pneg %p43
        $region34: #{tpu_custom_call.1} parent=31 // pred_check_branch
          %195 = sbr.rel (%p193) target = $region36
        $region35: #{tpu_custom_call.1} parent=31 // pred_region
          %196 = dma.done %s189, 2048
        $region36: #{tpu_custom_call.1} parent=31 // pred_fallthru
          _
        // Predicated region
        $region37: #{tpu_custom_call.1} parent=31 // pred_check
          %p197 = pneg %p64
        $region38: #{tpu_custom_call.1} parent=31 // pred_check_branch
          %199 = sbr.rel (%p197) target = $region40
        $region39: #{tpu_custom_call.1} parent=31 // pred_region
          %200 = dma.done [#allocation7], 128
        $region40: #{tpu_custom_call.1} parent=31 // pred_fallthru
          _
        %s201 = sand.u32 %s30, 1
        %s202 = scalar_lea.sflag [#allocation4], %s201
        %s203 = sand.u32 %s30, 1
        %s204 = smul.addr %s203, 128
        %s205 = scalar_lea.vmem [#allocation3], %s204
        %p206 = pneg %p43
        %p207 = pneg %p40
        %p208 = pneg %p64
        %p209 = pneg %p61
        %p210 = pneg %p85
        %p211 = pneg %p82
        %p212 = pneg %p106
        %p213 = pneg %p103
        %p214 = pneg %p127
        %p215 = pneg %p124
        %s216 = smul.u32 2, %s22
        %p217 = scmp.eq.s32.totalorder %s22, 0
        // Predicated region
        $region41: #{tpu_custom_call.1} parent=31 // pred_check
          %p218 = pneg %p217
        $region42: #{tpu_custom_call.1} parent=31 // pred_check_branch
          %220 = sbr.rel (%p218) target = $region44
        $region43: #{tpu_custom_call.1} parent=31 // pred_region
          %221 = vst [vmem:[#allocation2] sm:$0xf] 0.0
          %222 = vst [vmem:[#allocation2 + $0x4] sm:$0xf] 0.0
          %223 = vst [vmem:[#allocation2 + $0x8] sm:$0xf] 0.0
          %224 = vst [vmem:[#allocation2 + $0xc] sm:$0xf] 0.0
          %225 = vst [vmem:[#allocation2 + $0x10] sm:$0xf] 0.0
          %226 = vst [vmem:[#allocation2 + $0x14] sm:$0xf] 0.0
          %227 = vst [vmem:[#allocation2 + $0x18] sm:$0xf] 0.0
          %228 = vst [vmem:[#allocation2 + $0x1c] sm:$0xf] 0.0
          %229 = vst [vmem:[#allocation2 + $0x20] sm:$0xf] 0.0
          %230 = vst [vmem:[#allocation2 + $0x24] sm:$0xf] 0.0
          %231 = vst [vmem:[#allocation2 + $0x28] sm:$0xf] 0.0
          %232 = vst [vmem:[#allocation2 + $0x2c] sm:$0xf] 0.0
          %233 = vst [vmem:[#allocation2 + $0x30] sm:$0xf] 0.0
          %234 = vst [vmem:[#allocation2 + $0x34] sm:$0xf] 0.0
          %235 = vst [vmem:[#allocation2 + $0x38] sm:$0xf] 0.0
          %236 = vst [vmem:[#allocation2 + $0x3c] sm:$0xf] 0.0
        $region44: #{tpu_custom_call.1} parent=31 // pred_fallthru
          _
        %v237 = vld [vmem:[%s192] sm:$0xff]
        %v238 = vld [vmem:[%s192 + $0x8] sm:$0xff]
        %v239 = vld [vmem:[%s192 + $0x10] sm:$0xff]
        %v240 = vld [vmem:[%s192 + $0x18] sm:$0xff]
        %v241 = vld [vmem:[%s192 + $0x20] sm:$0xff]
        %v242 = vld [vmem:[%s192 + $0x28] sm:$0xff]
        %v243 = vld [vmem:[%s192 + $0x30] sm:$0xff]
        %v244 = vld [vmem:[%s192 + $0x38] sm:$0xff]
        %v245 = vld [vmem:[%s192 + $0x40] sm:$0xff]
        %v246 = vld [vmem:[%s192 + $0x48] sm:$0xff]
        %v247 = vld [vmem:[%s192 + $0x50] sm:$0xff]
        %v248 = vld [vmem:[%s192 + $0x58] sm:$0xff]
        %v249 = vld [vmem:[%s192 + $0x60] sm:$0xff]
        %v250 = vld [vmem:[%s192 + $0x68] sm:$0xff]
        %v251 = vld [vmem:[%s192 + $0x70] sm:$0xff]
        %v252 = vld [vmem:[%s192 + $0x78] sm:$0xff]
        %v253 = vld [vmem:[#allocation2] sm:$0xf]
        %v254 = vld [vmem:[#allocation2 + $0x4] sm:$0xf]
        %v255 = vld [vmem:[#allocation2 + $0x8] sm:$0xf]
        %v256 = vld [vmem:[#allocation2 + $0xc] sm:$0xf]
        %v257 = vld [vmem:[#allocation2 + $0x10] sm:$0xf]
        %v258 = vld [vmem:[#allocation2 + $0x14] sm:$0xf]
        %v259 = vld [vmem:[#allocation2 + $0x18] sm:$0xf]
        %v260 = vld [vmem:[#allocation2 + $0x1c] sm:$0xf]
        %v261 = vld [vmem:[#allocation2 + $0x20] sm:$0xf]
        %v262 = vld [vmem:[#allocation2 + $0x24] sm:$0xf]
        %v263 = vld [vmem:[#allocation2 + $0x28] sm:$0xf]
        %v264 = vld [vmem:[#allocation2 + $0x2c] sm:$0xf]
        %v265 = vld [vmem:[#allocation2 + $0x30] sm:$0xf]
        %v266 = vld [vmem:[#allocation2 + $0x34] sm:$0xf]
        %v267 = vld [vmem:[#allocation2 + $0x38] sm:$0xf]
        %v268 = vld [vmem:[#allocation2 + $0x3c] sm:$0xf]
        %v269 = vadd.f32 %v253, %v237
        %v270 = vadd.f32 %v254, %v238
        %v271 = vadd.f32 %v255, %v239
        %v272 = vadd.f32 %v256, %v240
        %v273 = vadd.f32 %v257, %v241
        %v274 = vadd.f32 %v258, %v242
        %v275 = vadd.f32 %v259, %v243
        %v276 = vadd.f32 %v260, %v244
        %v277 = vadd.f32 %v261, %v245
        %v278 = vadd.f32 %v262, %v246
        %v279 = vadd.f32 %v263, %v247
        %v280 = vadd.f32 %v264, %v248
        %v281 = vadd.f32 %v265, %v249
        %v282 = vadd.f32 %v266, %v250
        %v283 = vadd.f32 %v267, %v251
        %v284 = vadd.f32 %v268, %v252
        %v301 = vcombine.high %v237, %v237
        %v302 = vcombine.high %v238, %v238
        %v303 = vcombine.high %v239, %v239
        %v304 = vcombine.high %v240, %v240
        %v305 = vcombine.high %v241, %v241
        %v306 = vcombine.high %v242, %v242
        %v307 = vcombine.high %v243, %v243
        %v308 = vcombine.high %v244, %v244
        %v309 = vcombine.high %v245, %v245
        %v310 = vcombine.high %v246, %v246
        %v311 = vcombine.high %v247, %v247
        %v312 = vcombine.high %v248, %v248
        %v313 = vcombine.high %v249, %v249
        %v314 = vcombine.high %v250, %v250
        %v315 = vcombine.high %v251, %v251
        %v316 = vcombine.high %v252, %v252
        %v333 = vadd.f32 %v269, %v301
        %v334 = vadd.f32 %v270, %v302
        %v335 = vadd.f32 %v271, %v303
        %v336 = vadd.f32 %v272, %v304
        %v337 = vadd.f32 %v273, %v305
        %v338 = vadd.f32 %v274, %v306
        %v339 = vadd.f32 %v275, %v307
        %v340 = vadd.f32 %v276, %v308
        %v341 = vadd.f32 %v277, %v309
        %v342 = vadd.f32 %v278, %v310
        %v343 = vadd.f32 %v279, %v311
        %v344 = vadd.f32 %v280, %v312
        %v345 = vadd.f32 %v281, %v313
        %v346 = vadd.f32 %v282, %v314
        %v347 = vadd.f32 %v283, %v315
        %v348 = vadd.f32 %v284, %v316
        %349 = vst [vmem:[#allocation2] sm:$0xf] %v333
        %350 = vst [vmem:[#allocation2 + $0x4] sm:$0xf] %v334
        %351 = vst [vmem:[#allocation2 + $0x8] sm:$0xf] %v335
        %352 = vst [vmem:[#allocation2 + $0xc] sm:$0xf] %v336
        %353 = vst [vmem:[#allocation2 + $0x10] sm:$0xf] %v337
        %354 = vst [vmem:[#allocation2 + $0x14] sm:$0xf] %v338
        %355 = vst [vmem:[#allocation2 + $0x18] sm:$0xf] %v339
        %356 = vst [vmem:[#allocation2 + $0x1c] sm:$0xf] %v340
        %357 = vst [vmem:[#allocation2 + $0x20] sm:$0xf] %v341
        %358 = vst [vmem:[#allocation2 + $0x24] sm:$0xf] %v342
        %359 = vst [vmem:[#allocation2 + $0x28] sm:$0xf] %v343
        %360 = vst [vmem:[#allocation2 + $0x2c] sm:$0xf] %v344
        %361 = vst [vmem:[#allocation2 + $0x30] sm:$0xf] %v345
        %362 = vst [vmem:[#allocation2 + $0x34] sm:$0xf] %v346
        %363 = vst [vmem:[#allocation2 + $0x38] sm:$0xf] %v347
        %364 = vst [vmem:[#allocation2 + $0x3c] sm:$0xf] %v348
        %p365 = scmp.eq.s32.totalorder %s22, 1
        // Predicated region
        $region45: #{tpu_custom_call.1} parent=31 // pred_check
          %p366 = pneg %p365
        $region46: #{tpu_custom_call.1} parent=31 // pred_check_branch
          %368 = sbr.rel (%p366) target = $region48
        $region47: #{tpu_custom_call.1} parent=31 // pred_region
          %v369 = vld [vmem:[#allocation2] sm:$0xf]
          %v370 = vld [vmem:[#allocation2 + $0x4] sm:$0xf]
          %v371 = vld [vmem:[#allocation2 + $0x8] sm:$0xf]
          %v372 = vld [vmem:[#allocation2 + $0xc] sm:$0xf]
          %v373 = vld [vmem:[#allocation2 + $0x10] sm:$0xf]
          %v374 = vld [vmem:[#allocation2 + $0x14] sm:$0xf]
          %v375 = vld [vmem:[#allocation2 + $0x18] sm:$0xf]
          %v376 = vld [vmem:[#allocation2 + $0x1c] sm:$0xf]
          %v377 = vld [vmem:[#allocation2 + $0x20] sm:$0xf]
          %v378 = vld [vmem:[#allocation2 + $0x24] sm:$0xf]
          %v379 = vld [vmem:[#allocation2 + $0x28] sm:$0xf]
          %v380 = vld [vmem:[#allocation2 + $0x2c] sm:$0xf]
          %v381 = vld [vmem:[#allocation2 + $0x30] sm:$0xf]
          %v382 = vld [vmem:[#allocation2 + $0x34] sm:$0xf]
          %v383 = vld [vmem:[#allocation2 + $0x38] sm:$0xf]
          %v384 = vld [vmem:[#allocation2 + $0x3c] sm:$0xf]
          %vm385 = vcmask 1043456
          %v386 = vsel %vm385, %v369, 0.0
          %387 = vadd.xlane.f32.xlu0 %v386
          %v388 = vpop.xlane.xlu0 %387
          %v389 = vsel %vm385, %v370, 0.0
          %390 = vadd.xlane.f32.xlu0 %v389
          %v391 = vpop.xlane.xlu0 %390
          %v392 = vsel %vm385, %v371, 0.0
          %393 = vadd.xlane.f32.xlu0 %v392
          %v394 = vpop.xlane.xlu0 %393
          %v395 = vsel %vm385, %v372, 0.0
          %396 = vadd.xlane.f32.xlu0 %v395
          %v397 = vpop.xlane.xlu0 %396
          %v398 = vsel %vm385, %v373, 0.0
          %399 = vadd.xlane.f32.xlu0 %v398
          %v400 = vpop.xlane.xlu0 %399
          %v401 = vsel %vm385, %v374, 0.0
          %402 = vadd.xlane.f32.xlu0 %v401
          %v403 = vpop.xlane.xlu0 %402
          %v404 = vsel %vm385, %v375, 0.0
          %405 = vadd.xlane.f32.xlu0 %v404
          %v406 = vpop.xlane.xlu0 %405
          %v407 = vsel %vm385, %v376, 0.0
          %408 = vadd.xlane.f32.xlu0 %v407
          %v409 = vpop.xlane.xlu0 %408
          %v410 = vsel %vm385, %v377, 0.0
          %411 = vadd.xlane.f32.xlu0 %v410
          %v412 = vpop.xlane.xlu0 %411
          %v413 = vsel %vm385, %v378, 0.0
          %414 = vadd.xlane.f32.xlu0 %v413
          %v415 = vpop.xlane.xlu0 %414
          %v416 = vsel %vm385, %v379, 0.0
          %417 = vadd.xlane.f32.xlu0 %v416
          %v418 = vpop.xlane.xlu0 %417
          %v419 = vsel %vm385, %v380, 0.0
          %420 = vadd.xlane.f32.xlu0 %v419
          %v421 = vpop.xlane.xlu0 %420
          %v422 = vsel %vm385, %v381, 0.0
          %423 = vadd.xlane.f32.xlu0 %v422
          %v424 = vpop.xlane.xlu0 %423
          %v425 = vsel %vm385, %v382, 0.0
          %426 = vadd.xlane.f32.xlu0 %v425
          %v427 = vpop.xlane.xlu0 %426
          %v428 = vsel %vm385, %v383, 0.0
          %429 = vadd.xlane.f32.xlu0 %v428
          %v430 = vpop.xlane.xlu0 %429
          %v431 = vsel %vm385, %v384, 0.0
          %432 = vadd.xlane.f32.xlu0 %v431
          %v433 = vpop.xlane.xlu0 %432
          %v434 = vmul.f32 %v388, 0.001953125
          %v435 = vmul.f32 %v391, 0.001953125
          %v436 = vmul.f32 %v394, 0.001953125
          %v437 = vmul.f32 %v397, 0.001953125
          %v438 = vmul.f32 %v400, 0.001953125
          %v439 = vmul.f32 %v403, 0.001953125
          %v440 = vmul.f32 %v406, 0.001953125
          %v441 = vmul.f32 %v409, 0.001953125
          %v442 = vmul.f32 %v412, 0.001953125
          %v443 = vmul.f32 %v415, 0.001953125
          %v444 = vmul.f32 %v418, 0.001953125
          %v445 = vmul.f32 %v421, 0.001953125
          %v446 = vmul.f32 %v424, 0.001953125
          %v447 = vmul.f32 %v427, 0.001953125
          %v448 = vmul.f32 %v430, 0.001953125
          %v449 = vmul.f32 %v433, 0.001953125
          %v450 = vld [vmem:[#allocation6] sm:$0xff]
          %v451 = vld [vmem:[%s2] sm:$0x3]
          %v453 = vlaneseq
          %v454 = vshrl.u32 %v453, 7
          %v455 = vsub.s32 0, %v454
          %v456 = vrot.slane %v451, %v455
          %v457 = vlaneseq
          %v458 = vshrl.u32 %v457, 7
          %v459 = vsub.s32 1, %v458
          %v460 = vrot.slane %v451, %v459
          %v479 = vlaneseq
          %v480 = vand.u32 %v479, 127
          %v481 = vlaneseq
          %v482 = vshrl.u32 %v481, 7
          %v483 = vsub.s32 %v480, %v482
          %v484 = vrot.slane %v434, %v483
          %v485 = vlaneseq
          %v486 = vshrl.u32 %v485, 7
          %v487 = vsub.s32 %v480, %v486
          %v488 = vrot.slane %v435, %v487
          %v489 = vlaneseq
          %v490 = vshrl.u32 %v489, 7
          %v491 = vsub.s32 %v480, %v490
          %v492 = vrot.slane %v436, %v491
          %v493 = vlaneseq
          %v494 = vshrl.u32 %v493, 7
          %v495 = vsub.s32 %v480, %v494
          %v496 = vrot.slane %v437, %v495
          %v497 = vlaneseq
          %v498 = vshrl.u32 %v497, 7
          %v499 = vsub.s32 %v480, %v498
          %v500 = vrot.slane %v438, %v499
          %v501 = vlaneseq
          %v502 = vshrl.u32 %v501, 7
          %v503 = vsub.s32 %v480, %v502
          %v504 = vrot.slane %v439, %v503
          %v505 = vlaneseq
          %v506 = vshrl.u32 %v505, 7
          %v507 = vsub.s32 %v480, %v506
          %v508 = vrot.slane %v440, %v507
          %v509 = vlaneseq
          %v510 = vshrl.u32 %v509, 7
          %v511 = vsub.s32 %v480, %v510
          %v512 = vrot.slane %v441, %v511
          %v513 = vlaneseq
          %v514 = vshrl.u32 %v513, 7
          %v515 = vsub.s32 %v480, %v514
          %v516 = vrot.slane %v442, %v515
          %v517 = vlaneseq
          %v518 = vshrl.u32 %v517, 7
          %v519 = vsub.s32 %v480, %v518
          %v520 = vrot.slane %v443, %v519
          %v521 = vlaneseq
          %v522 = vshrl.u32 %v521, 7
          %v523 = vsub.s32 %v480, %v522
          %v524 = vrot.slane %v444, %v523
          %v525 = vlaneseq
          %v526 = vshrl.u32 %v525, 7
          %v527 = vsub.s32 %v480, %v526
          %v528 = vrot.slane %v445, %v527
          %v529 = vlaneseq
          %v530 = vshrl.u32 %v529, 7
          %v531 = vsub.s32 %v480, %v530
          %v532 = vrot.slane %v446, %v531
          %v533 = vlaneseq
          %v534 = vshrl.u32 %v533, 7
          %v535 = vsub.s32 %v480, %v534
          %v536 = vrot.slane %v447, %v535
          %v537 = vlaneseq
          %v538 = vshrl.u32 %v537, 7
          %v539 = vsub.s32 %v480, %v538
          %v540 = vrot.slane %v448, %v539
          %v541 = vlaneseq
          %v542 = vshrl.u32 %v541, 7
          %v543 = vsub.s32 %v480, %v542
          %v544 = vrot.slane %v449, %v543
          %vm545 = vcmask 1041409
          %v546 = vsel %vm545, %v488, %v484
          %vm547 = vcmask 1042434
          %v548 = vsel %vm547, %v492, %v546
          %vm549 = vcmask 1043459
          %v550 = vsel %vm549, %v496, %v548
          %vm551 = vcmask 1044484
          %v552 = vsel %vm551, %v500, %v550
          %vm553 = vcmask 1045509
          %v554 = vsel %vm553, %v504, %v552
          %vm555 = vcmask 1046534
          %v556 = vsel %vm555, %v508, %v554
          %vm557 = vcmask 1047559
          %v558 = vsel %vm557, %v512, %v556
          %v559 = vsel %vm545, %v520, %v516
          %v560 = vsel %vm547, %v524, %v559
          %v561 = vsel %vm549, %v528, %v560
          %v562 = vsel %vm551, %v532, %v561
          %v563 = vsel %vm553, %v536, %v562
          %v564 = vsel %vm555, %v540, %v563
          %v565 = vsel %vm557, %v544, %v564
          %v567 = vcombine.high %v450, %v450
          %vm568 = vcmask 31744
          %v569 = vsel %vm568, %v558, 0
          %v571 = vsel %vm568, %v565, 0
          %v573 = vsel %vm385, %v450, 0
          %v575 = vsel %vm385, %v567, 0
          %577 = vmatprep.subr.mxu0 %v575
          %578 = vmatpush1.msra.mxu0 %v573
          %579 = vmatprep.subr.mxu0 0.0
          %580 = vmatpush1.msra.mxu0 0.0
          %581 = vmatprep.subr.mxu0 0.0
          %582 = vmatpush1.msra.mxu0 0.0
          %583 = vmatprep.subr.mxu0 0.0
          %584 = vmatpush1.msra.mxu0 0.0
          %585 = vmatprep.subr.mxu0 0.0
          %586 = vmatpush1.msra.mxu0 0.0
          %587 = vmatprep.subr.mxu0 0.0
          %588 = vmatpush1.msra.mxu0 0.0
          %589 = vmatprep.subr.mxu0 0.0
          %590 = vmatpush1.msra.mxu0 0.0
          %591 = vmatprep.subr.mxu0 0.0
          %592 = vmatpush1.msra.mxu0 0.0
          %593 = vmatprep.subr.mxu0 0.0
          %594 = vmatpush1.msra.mxu0 0.0
          %595 = vmatprep.subr.mxu0 0.0
          %596 = vmatpush1.msra.mxu0 0.0
          %597 = vmatprep.subr.mxu0 0.0
          %598 = vmatpush1.msra.mxu0 0.0
          %599 = vmatprep.subr.mxu0 0.0
          %600 = vmatpush1.msra.mxu0 0.0
          %601 = vmatprep.subr.mxu0 0.0
          %602 = vmatpush1.msra.mxu0 0.0
          %603 = vmatprep.subr.mxu0 0.0
          %604 = vmatpush1.msra.mxu0 0.0
          %605 = vmatprep.subr.mxu0 0.0
          %606 = vmatpush1.msra.mxu0 0.0
          %607 = vmatprep.subr.mxu0 0.0
          %608 = vmatpush1.msra.mxu0 0.0
          %609 = vmatprep.subr.mxu0 0.0
          %610 = vmatpush1.msra.mxu0 0.0
          %611 = vmatprep.subr.mxu0 0.0
          %612 = vmatpush1.msra.mxu0 0.0
          %613 = vmatprep.subr.mxu0 0.0
          %614 = vmatpush1.msra.mxu0 0.0
          %615 = vmatprep.subr.mxu0 0.0
          %616 = vmatpush1.msra.mxu0 0.0
          %617 = vmatprep.subr.mxu0 0.0
          %618 = vmatpush1.msra.mxu0 0.0
          %619 = vmatprep.subr.mxu0 0.0
          %620 = vmatpush1.msra.mxu0 0.0
          %621 = vmatprep.subr.mxu0 0.0
          %622 = vmatpush1.msra.mxu0 0.0
          %623 = vmatprep.subr.mxu0 0.0
          %624 = vmatpush1.msra.mxu0 0.0
          %625 = vmatprep.subr.mxu0 0.0
          %626 = vmatpush1.msra.mxu0 0.0
          %627 = vmatprep.subr.mxu0 0.0
          %628 = vmatpush1.msra.mxu0 0.0
          %629 = vmatprep.subr.mxu0 0.0
          %630 = vmatpush1.msra.mxu0 0.0
          %631 = vmatprep.subr.mxu0 0.0
          %632 = vmatpush1.msra.mxu0 0.0
          %633 = vmatprep.subr.mxu0 0.0
          %634 = vmatpush1.msra.mxu0 0.0
          %635 = vmatprep.subr.mxu0 0.0
          %636 = vmatpush1.msra.mxu0 0.0
          %637 = vmatprep.subr.mxu0 0.0
          %638 = vmatpush1.msra.mxu0 0.0
          %639 = vmatprep.subr.mxu0 0.0
          %640 = vmatpush1.msra.mxu0 0.0
          %641 = vmatprep.mubr.f32.mxu0 0.0
          %642 = vmatmul.mubr.f32.gmra.mrb[0].mxu0 %v569
          %v643 = vpop.f32.mrb[0].mxu0
          %v644 = vadd.f32 %v456, %v643
          %v645 = vpop.f32.mrb[0].mxu0
          %v646 = vadd.f32 %v460, %v645
          %647 = vmatprep.mubr.f32.mxu0 0.0
          %648 = vmatmul.mubr.f32.gmra.mrb[0].mxu0 %v571
          %v649 = vpop.f32.mrb[0].mxu0
          %v650 = vadd.f32 %v456, %v649
          %v651 = vpop.f32.mrb[0].mxu0
          %v652 = vadd.f32 %v460, %v651
          %653 = vdwg.mxu0
          %654 = vst [vmem:[#allocation8] sm:$0xff] %v644
          %655 = vst [vmem:[#allocation8 + $0x8] sm:$0xff] %v650
          %656 = vst [vmem:[#allocation9] sm:$0xff] %v646
          %657 = vst [vmem:[#allocation9 + $0x8] sm:$0xff] %v652
        $region48: #{tpu_custom_call.1} parent=31 // pred_fallthru
          _
        // Predicated region
        $region49: #{tpu_custom_call.1} parent=31 // pred_check
          %p658 = pneg %p103
        $region50: #{tpu_custom_call.1} parent=31 // pred_check_branch
          %660 = sbr.rel (%p658) target = $region52
        $region51: #{tpu_custom_call.1} parent=31 // pred_region
          %s662 = ssub.s32 256, 256
          %663 = vsyncadd [#allocation5], %s662
          %s664 = sshll.u32 [#allocation8], 4
          %s665 = int_to_ptr.vmem [resolvable:$true] %s664
          %670 = dma.vmem_to_hbm [thread:$0]  %s665, 256, %s3, [#allocation5], 128, 128, 8
        $region52: #{tpu_custom_call.1} parent=31 // pred_fallthru
          _
        // Predicated region
        $region53: #{tpu_custom_call.1} parent=31 // pred_check
          %p671 = pneg %p124
        $region54: #{tpu_custom_call.1} parent=31 // pred_check_branch
          %673 = sbr.rel (%p671) target = $region56
        $region55: #{tpu_custom_call.1} parent=31 // pred_region
          %s675 = ssub.s32 256, 256
          %676 = vsyncadd [#allocation10], %s675
          %s677 = sshll.u32 [#allocation9], 4
          %s678 = int_to_ptr.vmem [resolvable:$true] %s677
          %683 = dma.vmem_to_hbm [thread:$0]  %s678, 256, %s4, [#allocation10], 128, 128, 8
        $region56: #{tpu_custom_call.1} parent=31 // pred_fallthru
          _
        // Predicated region
        $region57: #{tpu_custom_call.1} parent=31 // pred_check
          %p684 = pneg %p103
        $region58: #{tpu_custom_call.1} parent=31 // pred_check_branch
          %686 = sbr.rel (%p684) target = $region60
        $region59: #{tpu_custom_call.1} parent=31 // pred_region
          %687 = dma.done [#allocation5], 256
        $region60: #{tpu_custom_call.1} parent=31 // pred_fallthru
          _
        // Predicated region
        $region61: #{tpu_custom_call.1} parent=31 // pred_check
          %p688 = pneg %p124
        $region62: #{tpu_custom_call.1} parent=31 // pred_check_branch
          %690 = sbr.rel (%p688) target = $region64
        $region63: #{tpu_custom_call.1} parent=31 // pred_region
          %691 = dma.done [#allocation10], 256
        $region64: #{tpu_custom_call.1} parent=31 // pred_fallthru
          _
      $region32: #{tpu_custom_call.1} parent=5 // pred_fallthru
        _
      %p692 = scmp.le.s32.totalorder 2, %s17
      // Predicated region
      $region65: #{tpu_custom_call.1} parent=5 // pred_check
        %p693 = pneg %p692
      $region66: #{tpu_custom_call.1} parent=5 // pred_check_branch
        %695 = sbr.rel (%p693) target = $region68
      $region67: #{tpu_custom_call.1} parent=5 // pred_region
        %s696 = ssub.s32 %s17, 2
      $region68: #{tpu_custom_call.1} parent=5 // pred_fallthru
        _
    $region6: #{tpu_custom_call.1} parent=1 // loop_footer
      %s21 = sadd.s32 1, %s17
    $region7: #{tpu_custom_call.1} parent=1 // loop_footer_branch
      %16 = sbr.rel target = $region3
    $region8: #{tpu_custom_call.1} parent=1 // loop_exit
      _
    %697 = vsyncpa [#allocation4], 1
    %s698 = scalar_lea.sflag [#allocation4], 1
    %699 = vsyncpa %s698, 1
    %700 = vsyncpa [#allocation7], 1
    %701 = vsyncpa [#allocation5], 1
    %s702 = scalar_lea.sflag [#allocation5], 1
    %703 = vsyncpa %s702, 1
    %704 = vsyncpa [#allocation10], 1

</llo_original>
